<compile_context>
chip_gen: v7x
topology: tpu7x:2x2x1
jax: 0.10.0
libtpu: 0.0.40
codegen_flags: <defaults>
</compile_context>

<pallas_src>
import jax
import jax.numpy as jnp
from jax import lax
from jax.experimental import pallas as pl
from jax.experimental.pallas import tpu as pltpu


# ---------------------------------------------------------------------------
# Kernel: one grid step handles one (Bt, :) slab of the batch.
# ---------------------------------------------------------------------------
def _qvalue_kernel(s_ref, a_ref, w_s_ref, w_a_ref, b_in_ref,
                   w_fc2_ref, b_fc2_ref, w_out_ref, b_out_ref, out_ref):
    # Fused branch linears: two accumulated MXU matmuls (state / action
    # streamed separately), f32 accumulation, one bias + ReLU on the VPU.
    h = jnp.dot(s_ref[...], w_s_ref[...], preferred_element_type=jnp.float32)
    h = h + jnp.dot(a_ref[...], w_a_ref[...],
                    preferred_element_type=jnp.float32)
    h = jnp.maximum(h + b_in_ref[...], 0.0)                       # (Bt, 128)

    # fc2: (Bt, 128) x (128, 128) on the MXU.
    hidden = jnp.dot(h.astype(w_fc2_ref.dtype), w_fc2_ref[...],
                     preferred_element_type=jnp.float32)
    hidden = jnp.maximum(hidden + b_fc2_ref[...], 0.0)            # (Bt, 128)

    # fc_out (128 -> 1) as a trans_b matmul: (1,128) x (Bt,128)^T -> (1,Bt).
    # Result is naturally lane-dense, so the output store is a dense DMA.
    q_row = lax.dot_general(w_out_ref[...], hidden,
                            (((1,), (1,)), ((), ())),
                            preferred_element_type=jnp.float32)   # (1, Bt)
    q_row = q_row + b_out_ref[...]                                # (1,1) bcast
    out_ref[...] = q_row[None].astype(out_ref.dtype)              # (1, 1, Bt)


# ---------------------------------------------------------------------------
# Parameter packing (one-time): merge the four branch linears into
#   W_state (d_state, 128)  [cols 0:96 populated, block structure]
#   W_action (d_action, 128)[cols 96:128 populated]
# so the original slicing semantics are reproduced exactly.
# ---------------------------------------------------------------------------
def pack_qvalue_params(params, *, wp, ev, cv, d_state, d_action,
                       compute_dtype=jnp.bfloat16):
    ev_lo = d_state - cv - ev
    vf_lo = d_state - cv
    # Slices must be ordered and non-overlapping (as in the PyTorch forward).
    assert 0 <= wp <= ev_lo <= vf_lo <= d_state, "overlapping state slices"

    w_s = jnp.zeros((d_state, 128), jnp.float32)
    w_s = w_s.at[:wp, 0:32].set(params["w1"])                 # waypoints
    w_s = w_s.at[ev_lo:ev_lo + ev, 32:64].set(params["w2"])   # ego vehicle
    w_s = w_s.at[vf_lo:vf_lo + cv, 64:96].set(params["w3"])   # companion

    w_a = jnp.zeros((d_action, 128), jnp.float32)
    w_a = w_a.at[:, 96:128].set(params["w4"])                 # action

    b_in = jnp.concatenate(
        [params["b1"], params["b2"], params["b3"], params["b4"]], axis=1)

    return {
        "w_state": w_s.astype(compute_dtype),                  # (d_state, 128)
        "w_action": w_a.astype(compute_dtype),                 # (d_action, 128)
        "b_in": b_in.astype(jnp.float32),                      # (1, 128)
        "w_fc2": params["wfc2"].astype(compute_dtype),         # (128, 128)
        "b_fc2": params["bfc2"].astype(jnp.float32),           # (1, 128)
        "w_out": params["wout"].reshape(1, 128).astype(jnp.float32),  # (1,128)
        "b_out": params["bout"].reshape(1, 1).astype(jnp.float32),    # (1, 1)
    }


# ---------------------------------------------------------------------------
# Wrapper
# ---------------------------------------------------------------------------
def _round_up(x, m):
    return (x + m - 1) // m * m


def _choose_tiling(b, *, block_b=1024, single_block_max=512):
    """Returns (batch_tile, padded_batch)."""
    if b <= single_block_max:
        # Single un-pipelined step; 16-row alignment (bf16 sublane packing),
        # no 128-row padding for typical DDPG critic batches.
        bt = _round_up(b, 16)
        return bt, bt
    # Big tiles to amortize ~0.35us/grid-step overhead; even grid length so
    # both v7x TensorCores get equal work (harmless on v5e/v6e).
    n = max(2, pl.cdiv(b, block_b))
    if n % 2:
        n += 1
    bt = _round_up(pl.cdiv(b, n), 16)
    return bt, n * bt


def qvalue_forward(state, action, packed, *, block_b=1024):
    """Fused QValueNet forward: returns (B, 1) float32."""
    b, d_state = state.shape
    d_action = action.shape[1]
    dt = packed["w_state"].dtype

    bt, b_pad = _choose_tiling(b, block_b=block_b)
    n_blocks = b_pad // bt
    if b_pad != b:
        pad = ((0, b_pad - b), (0, 0))
        state = jnp.pad(state, pad)
        action = jnp.pad(action, pad)
    state = state.astype(dt)
    action = action.astype(dt)

    const2 = lambda i: (0, 0)   # weights / biases stay VMEM-resident
    out = pl.pallas_call(
        _qvalue_kernel,
        out_shape=jax.ShapeDtypeStruct((n_blocks, 1, bt), jnp.float32),
        grid=(n_blocks,),
        in_specs=[
            pl.BlockSpec((bt, d_state), lambda i: (i, 0)),    # streamed state
            pl.BlockSpec((bt, d_action), lambda i: (i, 0)),   # streamed action
            pl.BlockSpec(packed["w_state"].shape, const2),
            pl.BlockSpec(packed["w_action"].shape, const2),
            pl.BlockSpec(packed["b_in"].shape, const2),
            pl.BlockSpec(packed["w_fc2"].shape, const2),
            pl.BlockSpec(packed["b_fc2"].shape, const2),
            pl.BlockSpec(packed["w_out"].shape, const2),
            pl.BlockSpec(packed["b_out"].shape, const2),
        ],
        out_specs=pl.BlockSpec((1, 1, bt), lambda i: (i, 0, 0)),  # lane-dense
        compiler_params=pltpu.CompilerParams(
            dimension_semantics=("parallel",)),
    )(state, action, packed["w_state"], packed["w_action"], packed["b_in"],
      packed["w_fc2"], packed["b_fc2"], packed["w_out"], packed["b_out"])
    return out.reshape(-1)[:b].reshape(b, 1)


# ---------------------------------------------------------------------------
# Reference & demo
# ---------------------------------------------------------------------------
def _init_linear(key, fan_in, fan_out):
    # PyTorch nn.Linear default init: U(-1/sqrt(fan_in), 1/sqrt(fan_in)).
    kw, kb = jax.random.split(key)
    bound = 1.0 / jnp.sqrt(float(fan_in))
    w = jax.random.uniform(kw, (fan_in, fan_out), jnp.float32, -bound, bound)
    b = jax.random.uniform(kb, (1, fan_out), jnp.float32, -bound, bound)
    return w, b


def _reference_forward(state, action, params, *, wp, ev, cv):
    d_state = state.shape[1]
    with jax.default_matmul_precision("highest"):
        s_wp = state[:, :wp]
        s_ev = state[:, d_state - cv - ev:d_state - cv]
        s_vf = state[:, d_state - cv:]

        def lr(x, w, b):
            return jax.nn.relu(x @ w + b)

        h = jnp.concatenate((
            lr(s_wp, params["w1"], params["b1"]),
            lr(s_ev, params["w2"], params["b2"]),
            lr(s_vf, params["w3"], params["b3"]),
            lr(action, params["w4"], params["b4"]),
        ), axis=1)
        hidden = jax.nn.relu(h @ params["wfc2"] + params["bfc2"])
        return hidden @ params["wout"] + params["bout"]


if __name__ == "__main__":
    # state_dim = {'waypoints': 10, 'ego_vehicle': 6, 'companion_vehicle': 5}
    WP, EV, CV = 10, 6, 5
    D_STATE = WP + EV + CV          # 21
    D_ACTION = 3

    key = jax.random.PRNGKey(0)
    ks = jax.random.split(key, 10)

    params = {}
    params["w1"], params["b1"] = _init_linear(ks[0], WP, 32)
    params["w2"], params["b2"] = _init_linear(ks[1], EV, 32)
    params["w3"], params["b3"] = _init_linear(ks[2], CV, 32)
    params["w4"], params["b4"] = _init_linear(ks[3], D_ACTION, 32)
    params["wfc2"], params["bfc2"] = _init_linear(ks[4], 128, 128)
    params["wout"], params["bout"] = _init_linear(ks[5], 128, 1)

    packed_f32 = pack_qvalue_params(
        params, wp=WP, ev=EV, cv=CV, d_state=D_STATE, d_action=D_ACTION,
        compute_dtype=jnp.float32)
    packed_bf16 = pack_qvalue_params(
        params, wp=WP, ev=EV, cv=CV, d_state=D_STATE, d_action=D_ACTION)

    # ---- small batch: single-block fast path (bt = round_up(200, 16)) ----
    BATCH = 200
    state = jax.random.normal(ks[6], (BATCH, D_STATE), jnp.float32)
    action = jax.random.normal(ks[7], (BATCH, D_ACTION), jnp.float32)
    ref = _reference_forward(state, action, params, wp=WP, ev=EV, cv=CV)

    out = jax.block_until_ready(qvalue_forward(state, action, packed_f32))
    assert out.shape == (BATCH, 1), out.shape
    assert jnp.allclose(out, ref, atol=1e-4, rtol=1e-4), (
        float(jnp.max(jnp.abs(out - ref))))

    out_bf16 = jax.block_until_ready(qvalue_forward(state, action, packed_bf16))
    assert jnp.allclose(out_bf16, ref, atol=5e-2, rtol=5e-2), (
        float(jnp.max(jnp.abs(out_bf16 - ref))))

    # ---- larger batch: multi-block grid (even length for v7x), bf16 ----
    BATCH2 = 2000
    state2 = jax.random.normal(ks[8], (BATCH2, D_STATE), jnp.float32)
    action2 = jax.random.normal(ks[9], (BATCH2, D_ACTION), jnp.float32)
    ref2 = _reference_forward(state2, action2, params, wp=WP, ev=EV, cv=CV)
    out2 = jax.block_until_ready(qvalue_forward(state2, action2, packed_bf16))
    assert out2.shape == (BATCH2, 1), out2.shape
    assert jnp.allclose(out2, ref2, atol=5e-2, rtol=5e-2), (
        float(jnp.max(jnp.abs(out2 - ref2))))

    print("KERNEL_OK")
</pallas_src>

<mosaic_0001>
module attributes {stable_mosaic.version = 11 : i64} {
  func.func @_qvalue_kernel(%arg0: i32, %arg1: memref<208x21xf32, #tpu.memory_space<vmem>>, %arg2: memref<208x3xf32, #tpu.memory_space<vmem>>, %arg3: memref<21x128xf32, #tpu.memory_space<vmem>>, %arg4: memref<3x128xf32, #tpu.memory_space<vmem>>, %arg5: memref<1x128xf32, #tpu.memory_space<vmem>>, %arg6: memref<128x128xf32, #tpu.memory_space<vmem>>, %arg7: memref<1x128xf32, #tpu.memory_space<vmem>>, %arg8: memref<1x128xf32, #tpu.memory_space<vmem>>, %arg9: memref<1x1xf32, #tpu.memory_space<vmem>>, %arg10: memref<1x1x208xf32, #tpu.memory_space<vmem>>) attributes {dimension_semantics = [#tpu.dimension_semantics<parallel>], iteration_bounds = array<i64: 1>, scalar_prefetch = 0 : i64, scratch_operands = 0 : i64, tpu.core_type = #tpu.core_type<tc>, window_params = [{transform_indices = @transform_0, window_bounds = array<i64: 208, 21>}, {transform_indices = @transform_1, window_bounds = array<i64: 208, 3>}, {pipeline_mode = #tpu.pipeline_mode<synchronous>, transform_indices = @transform_2, window_bounds = array<i64: 21, 128>}, {pipeline_mode = #tpu.pipeline_mode<synchronous>, transform_indices = @transform_3, window_bounds = array<i64: 3, 128>}, {pipeline_mode = #tpu.pipeline_mode<synchronous>, transform_indices = @transform_4, window_bounds = array<i64: 1, 128>}, {pipeline_mode = #tpu.pipeline_mode<synchronous>, transform_indices = @transform_5, window_bounds = array<i64: 128, 128>}, {pipeline_mode = #tpu.pipeline_mode<synchronous>, transform_indices = @transform_6, window_bounds = array<i64: 1, 128>}, {pipeline_mode = #tpu.pipeline_mode<synchronous>, transform_indices = @transform_7, window_bounds = array<i64: 1, 128>}, {pipeline_mode = #tpu.pipeline_mode<synchronous>, transform_indices = @transform_8, window_bounds = array<i64: 1, 1>}, {transform_indices = @transform_9, window_bounds = array<i64: 1, 1, 208>}]} {
    %c0 = arith.constant 0 : index
    %c0_0 = arith.constant 0 : index
    %0 = vector.load %arg1[%c0, %c0_0] : memref<208x21xf32, #tpu.memory_space<vmem>>, vector<208x21xf32>
    %c0_1 = arith.constant 0 : index
    %c0_2 = arith.constant 0 : index
    %1 = vector.load %arg3[%c0_1, %c0_2] : memref<21x128xf32, #tpu.memory_space<vmem>>, vector<21x128xf32>
    %cst = arith.constant dense<0.000000e+00> : vector<208x128xf32>
    %2 = tpu.matmul %0, %1, %cst {dimension_numbers = #tpu.dot_dimension_numbers<[1], [0], [0], [1], [0, 0, 1, 1], [], []>} : vector<208x21xf32>, vector<21x128xf32>, vector<208x128xf32> -> vector<208x128xf32>
    %c0_3 = arith.constant 0 : index
    %c0_4 = arith.constant 0 : index
    %3 = vector.load %arg2[%c0_3, %c0_4] : memref<208x3xf32, #tpu.memory_space<vmem>>, vector<208x3xf32>
    %c0_5 = arith.constant 0 : index
    %c0_6 = arith.constant 0 : index
    %4 = vector.load %arg4[%c0_5, %c0_6] : memref<3x128xf32, #tpu.memory_space<vmem>>, vector<3x128xf32>
    %cst_7 = arith.constant dense<0.000000e+00> : vector<208x128xf32>
    %5 = tpu.matmul %3, %4, %cst_7 {dimension_numbers = #tpu.dot_dimension_numbers<[1], [0], [0], [1], [0, 0, 1, 1], [], []>} : vector<208x3xf32>, vector<3x128xf32>, vector<208x128xf32> -> vector<208x128xf32>
    %6 = arith.addf %2, %5 : vector<208x128xf32>
    %c0_8 = arith.constant 0 : index
    %c0_9 = arith.constant 0 : index
    %7 = vector.load %arg5[%c0_8, %c0_9] : memref<1x128xf32, #tpu.memory_space<vmem>>, vector<1x128xf32>
    %8 = vector.broadcast %7 : vector<1x128xf32> to vector<208x128xf32>
    %9 = arith.addf %6, %8 : vector<208x128xf32>
    %cst_10 = arith.constant 0.000000e+00 : f32
    %10 = vector.broadcast %cst_10 : f32 to vector<208x128xf32>
    %11 = arith.maximumf %9, %10 : vector<208x128xf32>
    %c0_11 = arith.constant 0 : index
    %c0_12 = arith.constant 0 : index
    %12 = vector.load %arg6[%c0_11, %c0_12] : memref<128x128xf32, #tpu.memory_space<vmem>>, vector<128x128xf32>
    %cst_13 = arith.constant dense<0.000000e+00> : vector<208x128xf32>
    %13 = tpu.matmul %11, %12, %cst_13 {dimension_numbers = #tpu.dot_dimension_numbers<[1], [0], [0], [1], [0, 0, 1, 1], [], []>} : vector<208x128xf32>, vector<128x128xf32>, vector<208x128xf32> -> vector<208x128xf32>
    %c0_14 = arith.constant 0 : index
    %c0_15 = arith.constant 0 : index
    %14 = vector.load %arg7[%c0_14, %c0_15] : memref<1x128xf32, #tpu.memory_space<vmem>>, vector<1x128xf32>
    %15 = vector.broadcast %14 : vector<1x128xf32> to vector<208x128xf32>
    %16 = arith.addf %13, %15 : vector<208x128xf32>
    %cst_16 = arith.constant 0.000000e+00 : f32
    %17 = vector.broadcast %cst_16 : f32 to vector<208x128xf32>
    %18 = arith.maximumf %16, %17 : vector<208x128xf32>
    %c0_17 = arith.constant 0 : index
    %c0_18 = arith.constant 0 : index
    %19 = vector.load %arg8[%c0_17, %c0_18] : memref<1x128xf32, #tpu.memory_space<vmem>>, vector<1x128xf32>
    %cst_19 = arith.constant dense<0.000000e+00> : vector<1x208xf32>
    %20 = tpu.matmul %19, %18, %cst_19 {dimension_numbers = #tpu.dot_dimension_numbers<[1], [1], [0], [0], [0, 0, 1, 0], [], []>} : vector<1x128xf32>, vector<208x128xf32>, vector<1x208xf32> -> vector<1x208xf32>
    %c0_20 = arith.constant 0 : index
    %c0_21 = arith.constant 0 : index
    %21 = vector.load %arg9[%c0_20, %c0_21] : memref<1x1xf32, #tpu.memory_space<vmem>>, vector<1x1xf32>
    %22 = vector.broadcast %21 : vector<1x1xf32> to vector<1x208xf32>
    %23 = arith.addf %20, %22 : vector<1x208xf32>
    %24 = vector.shape_cast %23 : vector<1x208xf32> to vector<1x1x208xf32>
    %c0_22 = arith.constant 0 : index
    %c0_23 = arith.constant 0 : index
    %c0_24 = arith.constant 0 : index
    %25 = vector.load %arg10[%c0_22, %c0_23, %c0_24] : memref<1x1x208xf32, #tpu.memory_space<vmem>>, vector<1x1x208xf32>
    tpu.vector_store %arg10[%c0_22, %c0_23, %c0_24], %24 {strides = array<i32>} : memref<1x1x208xf32, #tpu.memory_space<vmem>>, vector<1x1x208xf32>,
    return
  }
  func.func @transform_0(%arg0: i32) -> (i32, i32) {
    %c0_i32 = arith.constant 0 : i32
    %c0_i32_0 = arith.constant 0 : i32
    return %arg0, %c0_i32 : i32, i32
  }
  func.func @transform_1(%arg0: i32) -> (i32, i32) {
    %c0_i32 = arith.constant 0 : i32
    %c0_i32_0 = arith.constant 0 : i32
    return %arg0, %c0_i32 : i32, i32
  }
  func.func @transform_2(%arg0: i32) -> (i32, i32) {
    %c0_i32 = arith.constant 0 : i32
    %c0_i32_0 = arith.constant 0 : i32
    %c0_i32_1 = arith.constant 0 : i32
    return %c0_i32, %c0_i32_0 : i32, i32
  }
  func.func @transform_3(%arg0: i32) -> (i32, i32) {
    %c0_i32 = arith.constant 0 : i32
    %c0_i32_0 = arith.constant 0 : i32
    %c0_i32_1 = arith.constant 0 : i32
    return %c0_i32, %c0_i32_0 : i32, i32
  }
  func.func @transform_4(%arg0: i32) -> (i32, i32) {
    %c0_i32 = arith.constant 0 : i32
    %c0_i32_0 = arith.constant 0 : i32
    %c0_i32_1 = arith.constant 0 : i32
    return %c0_i32, %c0_i32_0 : i32, i32
  }
  func.func @transform_5(%arg0: i32) -> (i32, i32) {
    %c0_i32 = arith.constant 0 : i32
    %c0_i32_0 = arith.constant 0 : i32
    %c0_i32_1 = arith.constant 0 : i32
    return %c0_i32, %c0_i32_0 : i32, i32
  }
  func.func @transform_6(%arg0: i32) -> (i32, i32) {
    %c0_i32 = arith.constant 0 : i32
    %c0_i32_0 = arith.constant 0 : i32
    %c0_i32_1 = arith.constant 0 : i32
    return %c0_i32, %c0_i32_0 : i32, i32
  }
  func.func @transform_7(%arg0: i32) -> (i32, i32) {
    %c0_i32 = arith.constant 0 : i32
    %c0_i32_0 = arith.constant 0 : i32
    %c0_i32_1 = arith.constant 0 : i32
    return %c0_i32, %c0_i32_0 : i32, i32
  }
  func.func @transform_8(%arg0: i32) -> (i32, i32) {
    %c0_i32 = arith.constant 0 : i32
    %c0_i32_0 = arith.constant 0 : i32
    %c0_i32_1 = arith.constant 0 : i32
    return %c0_i32, %c0_i32_0 : i32, i32
  }
  func.func @transform_9(%arg0: i32) -> (i32, i32, i32) {
    %c0_i32 = arith.constant 0 : i32
    %c0_i32_0 = arith.constant 0 : i32
    %c0_i32_1 = arith.constant 0 : i32
    return %arg0, %c0_i32, %c0_i32_0 : i32, i32, i32
  }
}

</mosaic_0001>

<llo_original>
// kernel: tpu_custom_call.1
$region0: #{tpu_custom_call.1}
  #allocation0 [shape = 'u32[]', space=smem, size = 0x4, offset = 0x4, fixed_abs, tag = 'smem constant byte address 0x4 - core index']
  #allocation1 [shape = 'u32[144,128]{1,0:T(1,128)}', space=vmem, size = 0x12000, scoped, tag = 'internal scratch']
  #allocation2 [shape = 'f32[1,1]{1,0:T(1,128)S(1)}', space=vmem, size = 0x200, scoped, tag = 'scoped memory for tpu_custom_call.1']
  %s0 = inlined_call_operand.vmem [shape: f32[208,21], index: 0, kind: input, shape index: {}]
  %s1 = inlined_call_operand.vmem [shape: f32[208,3], index: 1, kind: input, shape index: {}]
  %s2 = inlined_call_operand.vmem [shape: f32[21,128], index: 2, kind: input, shape index: {}]
  %s3 = inlined_call_operand.vmem [shape: f32[3,128], index: 3, kind: input, shape index: {}]
  %s4 = inlined_call_operand.vmem [shape: f32[1,128], index: 4, kind: input, shape index: {}]
  %s5 = inlined_call_operand.vmem [shape: f32[128,128], index: 5, kind: input, shape index: {}]
  %s6 = inlined_call_operand.vmem [shape: f32[1,128], index: 6, kind: input, shape index: {}]
  %s7 = inlined_call_operand.vmem [shape: f32[1,128], index: 7, kind: input, shape index: {}]
  %s8 = inlined_call_operand.<no memory space> [shape: f32[1,1], index: 8, kind: input, shape index: {}]
  %s9 = inlined_call_operand.hbm [shape: f32[1,1,208], index: 9, kind: output, shape index: {}]
  %s10 = sld [smem:[#allocation0]]
  $region46: #{tpu_custom_call.1} parent=0
    _
  %s12 = ssub.s32 1, %s10
  %s13 = scalar_select 0, %s12, %s10
  %v14 = vstv %s8
  %15 = vst [vmem:[#allocation2] sm:$0x1] %v14
  $region1: #{tpu_custom_call.1} parent=0
    #allocation3 [shape = 'u8[1024]{0}', space=vmem, size = 0x400, scoped, tag = 'output window, operand 0, single buffered']
    #allocation4 [shape = 's32[1]{0}', space=sflag, size = 0x4, scoped, tag = 'scoped memory for tpu_custom_call.1']
    %16 = vsyncpa [#allocation4], 0
    // Predicated region
    $region2: #{tpu_custom_call.1} parent=1 // pred_check
      _
    $region3: #{tpu_custom_call.1} parent=1 // pred_check_branch
      %18 = sbr.rel (0) target = $region5
    $region4: #{tpu_custom_call.1} parent=1 // pred_region
      _
    $region5: #{tpu_custom_call.1} parent=1 // pred_fallthru
      _
    // Predicated region
    $region6: #{tpu_custom_call.1} parent=1 // pred_check
      _
    $region7: #{tpu_custom_call.1} parent=1 // pred_check_branch
      %20 = sbr.rel (0) target = $region9
    $region8: #{tpu_custom_call.1} parent=1 // pred_region
      _
    $region9: #{tpu_custom_call.1} parent=1 // pred_fallthru
      _
    // Predicated region
    $region10: #{tpu_custom_call.1} parent=1 // pred_check
      _
    $region11: #{tpu_custom_call.1} parent=1 // pred_check_branch
      %22 = sbr.rel (0) target = $region13
    $region12: #{tpu_custom_call.1} parent=1 // pred_region
      _
    $region13: #{tpu_custom_call.1} parent=1 // pred_fallthru
      _
    // Predicated region
    $region14: #{tpu_custom_call.1} parent=1 // pred_check
      _
    $region15: #{tpu_custom_call.1} parent=1 // pred_check_branch
      %24 = sbr.rel (0) target = $region17
    $region16: #{tpu_custom_call.1} parent=1 // pred_region
      _
    $region17: #{tpu_custom_call.1} parent=1 // pred_fallthru
      _
    // Predicated region
    $region18: #{tpu_custom_call.1} parent=1 // pred_check
      _
    $region19: #{tpu_custom_call.1} parent=1 // pred_check_branch
      %26 = sbr.rel (0) target = $region21
    $region20: #{tpu_custom_call.1} parent=1 // pred_region
      _
    $region21: #{tpu_custom_call.1} parent=1 // pred_fallthru
      _
    // Predicated region
    $region22: #{tpu_custom_call.1} parent=1 // pred_check
      _
    $region23: #{tpu_custom_call.1} parent=1 // pred_check_branch
      %28 = sbr.rel (0) target = $region25
    $region24: #{tpu_custom_call.1} parent=1 // pred_region
      _
    $region25: #{tpu_custom_call.1} parent=1 // pred_fallthru
      _
    // Predicated region
    $region26: #{tpu_custom_call.1} parent=1 // pred_check
      _
    $region27: #{tpu_custom_call.1} parent=1 // pred_check_branch
      %30 = sbr.rel (0) target = $region29
    $region28: #{tpu_custom_call.1} parent=1 // pred_region
      _
    $region29: #{tpu_custom_call.1} parent=1 // pred_fallthru
      _
    // Predicated region
    $region30: #{tpu_custom_call.1} parent=1 // pred_check
      _
    $region31: #{tpu_custom_call.1} parent=1 // pred_check_branch
      %32 = sbr.rel (0) target = $region33
    $region32: #{tpu_custom_call.1} parent=1 // pred_region
      _
    $region33: #{tpu_custom_call.1} parent=1 // pred_fallthru
      _
    // Predicated region
    $region34: #{tpu_custom_call.1} parent=1 // pred_check
      _
    $region35: #{tpu_custom_call.1} parent=1 // pred_check_branch
      %34 = sbr.rel (0) target = $region37
    $region36: #{tpu_custom_call.1} parent=1 // pred_region
      _
    $region37: #{tpu_custom_call.1} parent=1 // pred_fallthru
      _
    %v35 = vld [vmem:[%s0] sm:$0xff]
    %v36 = vld [vmem:[%s0 + $0x8] sm:$0xff]
    %v37 = vld [vmem:[%s0 + $0x10] sm:$0xff]
    %v38 = vld [vmem:[%s0 + $0x18] sm:$0xff]
    %v39 = vld [vmem:[%s0 + $0x20] sm:$0xff]
    %v40 = vld [vmem:[%s0 + $0x28] sm:$0xff]
    %v41 = vld [vmem:[%s0 + $0x30] sm:$0xff]
    %v42 = vld [vmem:[%s0 + $0x38] sm:$0xff]
    %v43 = vld [vmem:[%s0 + $0x40] sm:$0xff]
    %v44 = vld [vmem:[%s0 + $0x48] sm:$0xff]
    %v45 = vld [vmem:[%s0 + $0x50] sm:$0xff]
    %v46 = vld [vmem:[%s0 + $0x58] sm:$0xff]
    %v47 = vld [vmem:[%s0 + $0x60] sm:$0xff]
    %v48 = vld [vmem:[%s0 + $0x68] sm:$0xff]
    %v49 = vld [vmem:[%s0 + $0x70] sm:$0xff]
    %v50 = vld [vmem:[%s0 + $0x78] sm:$0xff]
    %v51 = vld [vmem:[%s0 + $0x80] sm:$0xff]
    %v52 = vld [vmem:[%s0 + $0x88] sm:$0xff]
    %v53 = vld [vmem:[%s0 + $0x90] sm:$0xff]
    %v54 = vld [vmem:[%s0 + $0x98] sm:$0xff]
    %v55 = vld [vmem:[%s0 + $0xa0] sm:$0xff]
    %v56 = vld [vmem:[%s0 + $0xa8] sm:$0xff]
    %v57 = vld [vmem:[%s0 + $0xb0] sm:$0xff]
    %v58 = vld [vmem:[%s0 + $0xb8] sm:$0xff]
    %v59 = vld [vmem:[%s0 + $0xc0] sm:$0xff]
    %v60 = vld [vmem:[%s0 + $0xc8] sm:$0xff]
    %v61 = vld [vmem:[%s2] sm:$0xff]
    %v62 = vld [vmem:[%s2 + $0x8] sm:$0xff]
    %v63 = vld [vmem:[%s2 + $0x10] sm:$0x1f]
    %v64 = vld [vmem:[%s1] sm:$0xff]
    %v65 = vld [vmem:[%s1 + $0x8] sm:$0xff]
    %v66 = vld [vmem:[%s1 + $0x10] sm:$0xff]
    %v67 = vld [vmem:[%s1 + $0x18] sm:$0xff]
    %v68 = vld [vmem:[%s1 + $0x20] sm:$0xff]
    %v69 = vld [vmem:[%s1 + $0x28] sm:$0xff]
    %v70 = vld [vmem:[%s1 + $0x30] sm:$0xff]
    %v71 = vld [vmem:[%s1 + $0x38] sm:$0xff]
    %v72 = vld [vmem:[%s1 + $0x40] sm:$0xff]
    %v73 = vld [vmem:[%s1 + $0x48] sm:$0xff]
    %v74 = vld [vmem:[%s1 + $0x50] sm:$0xff]
    %v75 = vld [vmem:[%s1 + $0x58] sm:$0xff]
    %v76 = vld [vmem:[%s1 + $0x60] sm:$0xff]
    %v77 = vld [vmem:[%s1 + $0x68] sm:$0xff]
    %v78 = vld [vmem:[%s1 + $0x70] sm:$0xff]
    %v79 = vld [vmem:[%s1 + $0x78] sm:$0xff]
    %v80 = vld [vmem:[%s1 + $0x80] sm:$0xff]
    %v81 = vld [vmem:[%s1 + $0x88] sm:$0xff]
    %v82 = vld [vmem:[%s1 + $0x90] sm:$0xff]
    %v83 = vld [vmem:[%s1 + $0x98] sm:$0xff]
    %v84 = vld [vmem:[%s1 + $0xa0] sm:$0xff]
    %v85 = vld [vmem:[%s1 + $0xa8] sm:$0xff]
    %v86 = vld [vmem:[%s1 + $0xb0] sm:$0xff]
    %v87 = vld [vmem:[%s1 + $0xb8] sm:$0xff]
    %v88 = vld [vmem:[%s1 + $0xc0] sm:$0xff]
    %v89 = vld [vmem:[%s1 + $0xc8] sm:$0xff]
    %v90 = vld [vmem:[%s3] sm:$0x7]
    %vm91 = vcmask 23552
    %v93 = vsel %vm91, %v64, 0
    %v96 = vsel %vm91, %v65, 0
    %v99 = vsel %vm91, %v66, 0
    %v102 = vsel %vm91, %v67, 0
    %v105 = vsel %vm91, %v68, 0
    %v108 = vsel %vm91, %v69, 0
    %v111 = vsel %vm91, %v70, 0
    %v114 = vsel %vm91, %v71, 0
    %v117 = vsel %vm91, %v72, 0
    %v120 = vsel %vm91, %v73, 0
    %v123 = vsel %vm91, %v74, 0
    %v126 = vsel %vm91, %v75, 0
    %v129 = vsel %vm91, %v76, 0
    %v132 = vsel %vm91, %v77, 0
    %v135 = vsel %vm91, %v78, 0
    %v138 = vsel %vm91, %v79, 0
    %v141 = vsel %vm91, %v80, 0
    %v144 = vsel %vm91, %v81, 0
    %v147 = vsel %vm91, %v82, 0
    %v150 = vsel %vm91, %v83, 0
    %v153 = vsel %vm91, %v84, 0
    %v156 = vsel %vm91, %v85, 0
    %v159 = vsel %vm91, %v86, 0
    %v162 = vsel %vm91, %v87, 0
    %v165 = vsel %vm91, %v88, 0
    %v168 = vsel %vm91, %v89, 0
    %vm170 = vcmask 1042432
    %v172 = vsel %vm170, %v90, 0
    %174 = vmatprep.subr.mxu0 0.0
    %175 = vmatpush1.msra.mxu0 %v172
    %176 = vmatprep.subr.mxu0 0.0
    %177 = vmatpush1.msra.mxu0 0.0
    %178 = vmatprep.subr.mxu0 0.0
    %179 = vmatpush1.msra.mxu0 0.0
    %180 = vmatprep.subr.mxu0 0.0
    %181 = vmatpush1.msra.mxu0 0.0
    %182 = vmatprep.subr.mxu0 0.0
    %183 = vmatpush1.msra.mxu0 0.0
    %184 = vmatprep.subr.mxu0 0.0
    %185 = vmatpush1.msra.mxu0 0.0
    %186 = vmatprep.subr.mxu0 0.0
    %187 = vmatpush1.msra.mxu0 0.0
    %188 = vmatprep.subr.mxu0 0.0
    %189 = vmatpush1.msra.mxu0 0.0
    %190 = vmatprep.subr.mxu0 0.0
    %191 = vmatpush1.msra.mxu0 0.0
    %192 = vmatprep.subr.mxu0 0.0
    %193 = vmatpush1.msra.mxu0 0.0
    %194 = vmatprep.subr.mxu0 0.0
    %195 = vmatpush1.msra.mxu0 0.0
    %196 = vmatprep.subr.mxu0 0.0
    %197 = vmatpush1.msra.mxu0 0.0
    %198 = vmatprep.subr.mxu0 0.0
    %199 = vmatpush1.msra.mxu0 0.0
    %200 = vmatprep.subr.mxu0 0.0
    %201 = vmatpush1.msra.mxu0 0.0
    %202 = vmatprep.subr.mxu0 0.0
    %203 = vmatpush1.msra.mxu0 0.0
    %204 = vmatprep.subr.mxu0 0.0
    %205 = vmatpush1.msra.mxu0 0.0
    %206 = vmatprep.subr.mxu0 0.0
    %207 = vmatpush1.msra.mxu0 0.0
    %208 = vmatprep.subr.mxu0 0.0
    %209 = vmatpush1.msra.mxu0 0.0
    %210 = vmatprep.subr.mxu0 0.0
    %211 = vmatpush1.msra.mxu0 0.0
    %212 = vmatprep.subr.mxu0 0.0
    %213 = vmatpush1.msra.mxu0 0.0
    %214 = vmatprep.subr.mxu0 0.0
    %215 = vmatpush1.msra.mxu0 0.0
    %216 = vmatprep.subr.mxu0 0.0
    %217 = vmatpush1.msra.mxu0 0.0
    %218 = vmatprep.subr.mxu0 0.0
    %219 = vmatpush1.msra.mxu0 0.0
    %220 = vmatprep.subr.mxu0 0.0
    %221 = vmatpush1.msra.mxu0 0.0
    %222 = vmatprep.subr.mxu0 0.0
    %223 = vmatpush1.msra.mxu0 0.0
    %224 = vmatprep.subr.mxu0 0.0
    %225 = vmatpush1.msra.mxu0 0.0
    %226 = vmatprep.subr.mxu0 0.0
    %227 = vmatpush1.msra.mxu0 0.0
    %228 = vmatprep.subr.mxu0 0.0
    %229 = vmatpush1.msra.mxu0 0.0
    %230 = vmatprep.subr.mxu0 0.0
    %231 = vmatpush1.msra.mxu0 0.0
    %232 = vmatprep.subr.mxu0 0.0
    %233 = vmatpush1.msra.mxu0 0.0
    %234 = vmatprep.subr.mxu0 0.0
    %235 = vmatpush1.msra.mxu0 0.0
    %236 = vmatprep.subr.mxu0 0.0
    %237 = vmatpush1.msra.mxu0 0.0
    %238 = vmatprep.mubr.f32.mxu0 0.0
    %239 = vmatmul.mubr.f32.gmra.mrb[0].mxu0 %v93
    %v240 = vpop.f32.mrb[0].mxu0
    %v241 = vadd.f32 0.0, %v240
    %v242 = vpop.f32.mrb[0].mxu0
    %243 = vmatprep.mubr.f32.mxu0 0.0
    %244 = vmatmul.mubr.f32.gmra.mrb[0].mxu0 %v96
    %v245 = vpop.f32.mrb[0].mxu0
    %v246 = vadd.f32 0.0, %v245
    %v247 = vpop.f32.mrb[0].mxu0
    %248 = vmatprep.mubr.f32.mxu0 0.0
    %249 = vmatmul.mubr.f32.gmra.mrb[0].mxu0 %v99
    %v250 = vpop.f32.mrb[0].mxu0
    %v251 = vadd.f32 0.0, %v250
    %v252 = vpop.f32.mrb[0].mxu0
    %253 = vmatprep.mubr.f32.mxu0 0.0
    %254 = vmatmul.mubr.f32.gmra.mrb[0].mxu0 %v102
    %v255 = vpop.f32.mrb[0].mxu0
    %v256 = vadd.f32 0.0, %v255
    %v257 = vpop.f32.mrb[0].mxu0
    %258 = vmatprep.mubr.f32.mxu0 0.0
    %259 = vmatmul.mubr.f32.gmra.mrb[0].mxu0 %v105
    %v260 = vpop.f32.mrb[0].mxu0
    %v261 = vadd.f32 0.0, %v260
    %v262 = vpop.f32.mrb[0].mxu0
    %263 = vmatprep.mubr.f32.mxu0 0.0
    %264 = vmatmul.mubr.f32.gmra.mrb[0].mxu0 %v108
    %v265 = vpop.f32.mrb[0].mxu0
    %v266 = vadd.f32 0.0, %v265
    %v267 = vpop.f32.mrb[0].mxu0
    %268 = vmatprep.mubr.f32.mxu0 0.0
    %269 = vmatmul.mubr.f32.gmra.mrb[0].mxu0 %v111
    %v270 = vpop.f32.mrb[0].mxu0
    %v271 = vadd.f32 0.0, %v270
    %v272 = vpop.f32.mrb[0].mxu0
    %273 = vmatprep.mubr.f32.mxu0 0.0
    %274 = vmatmul.mubr.f32.gmra.mrb[0].mxu0 %v114
    %v275 = vpop.f32.mrb[0].mxu0
    %v276 = vadd.f32 0.0, %v275
    %v277 = vpop.f32.mrb[0].mxu0
    %278 = vmatprep.mubr.f32.mxu0 0.0
    %279 = vmatmul.mubr.f32.gmra.mrb[0].mxu0 %v117
    %v280 = vpop.f32.mrb[0].mxu0
    %v281 = vadd.f32 0.0, %v280
    %v282 = vpop.f32.mrb[0].mxu0
    %283 = vmatprep.mubr.f32.mxu0 0.0
    %284 = vmatmul.mubr.f32.gmra.mrb[0].mxu0 %v120
    %v285 = vpop.f32.mrb[0].mxu0
    %v286 = vadd.f32 0.0, %v285
    %v287 = vpop.f32.mrb[0].mxu0
    %288 = vmatprep.mubr.f32.mxu0 0.0
    %289 = vmatmul.mubr.f32.gmra.mrb[0].mxu0 %v123
    %v290 = vpop.f32.mrb[0].mxu0
    %v291 = vadd.f32 0.0, %v290
    %v292 = vpop.f32.mrb[0].mxu0
    %293 = vmatprep.mubr.f32.mxu0 0.0
    %294 = vmatmul.mubr.f32.gmra.mrb[0].mxu0 %v126
    %v295 = vpop.f32.mrb[0].mxu0
    %v296 = vadd.f32 0.0, %v295
    %v297 = vpop.f32.mrb[0].mxu0
    %298 = vmatprep.mubr.f32.mxu0 0.0
    %299 = vmatmul.mubr.f32.gmra.mrb[0].mxu0 %v129
    %v300 = vpop.f32.mrb[0].mxu0
    %v301 = vadd.f32 0.0, %v300
    %v302 = vpop.f32.mrb[0].mxu0
    %303 = vmatprep.mubr.f32.mxu0 0.0
    %304 = vmatmul.mubr.f32.gmra.mrb[0].mxu0 %v132
    %v305 = vpop.f32.mrb[0].mxu0
    %v306 = vadd.f32 0.0, %v305
    %v307 = vpop.f32.mrb[0].mxu0
    %308 = vmatprep.mubr.f32.mxu0 0.0
    %309 = vmatmul.mubr.f32.gmra.mrb[0].mxu0 %v135
    %v310 = vpop.f32.mrb[0].mxu0
    %v311 = vadd.f32 0.0, %v310
    %v312 = vpop.f32.mrb[0].mxu0
    %313 = vmatprep.mubr.f32.mxu0 0.0
    %314 = vmatmul.mubr.f32.gmra.mrb[0].mxu0 %v138
    %v315 = vpop.f32.mrb[0].mxu0
    %v316 = vadd.f32 0.0, %v315
    %v317 = vpop.f32.mrb[0].mxu0
    %318 = vmatprep.mubr.f32.mxu0 0.0
    %319 = vmatmul.mubr.f32.gmra.mrb[0].mxu0 %v141
    %v320 = vpop.f32.mrb[0].mxu0
    %v321 = vadd.f32 0.0, %v320
    %v322 = vpop.f32.mrb[0].mxu0
    %323 = vmatprep.mubr.f32.mxu0 0.0
    %324 = vmatmul.mubr.f32.gmra.mrb[0].mxu0 %v144
    %v325 = vpop.f32.mrb[0].mxu0
    %v326 = vadd.f32 0.0, %v325
    %v327 = vpop.f32.mrb[0].mxu0
    %328 = vmatprep.mubr.f32.mxu0 0.0
    %329 = vmatmul.mubr.f32.gmra.mrb[0].mxu0 %v147
    %v330 = vpop.f32.mrb[0].mxu0
    %v331 = vadd.f32 0.0, %v330
    %v332 = vpop.f32.mrb[0].mxu0
    %333 = vmatprep.mubr.f32.mxu0 0.0
    %334 = vmatmul.mubr.f32.gmra.mrb[0].mxu0 %v150
    %v335 = vpop.f32.mrb[0].mxu0
    %v336 = vadd.f32 0.0, %v335
    %v337 = vpop.f32.mrb[0].mxu0
    %338 = vmatprep.mubr.f32.mxu0 0.0
    %339 = vmatmul.mubr.f32.gmra.mrb[0].mxu0 %v153
    %v340 = vpop.f32.mrb[0].mxu0
    %v341 = vadd.f32 0.0, %v340
    %v342 = vpop.f32.mrb[0].mxu0
    %343 = vmatprep.mubr.f32.mxu0 0.0
    %344 = vmatmul.mubr.f32.gmra.mrb[0].mxu0 %v156
    %v345 = vpop.f32.mrb[0].mxu0
    %v346 = vadd.f32 0.0, %v345
    %v347 = vpop.f32.mrb[0].mxu0
    %348 = vmatprep.mubr.f32.mxu0 0.0
    %349 = vmatmul.mubr.f32.gmra.mrb[0].mxu0 %v159
    %v350 = vpop.f32.mrb[0].mxu0
    %v351 = vadd.f32 0.0, %v350
    %v352 = vpop.f32.mrb[0].mxu0
    %353 = vmatprep.mubr.f32.mxu0 0.0
    %354 = vmatmul.mubr.f32.gmra.mrb[0].mxu0 %v162
    %v355 = vpop.f32.mrb[0].mxu0
    %v356 = vadd.f32 0.0, %v355
    %v357 = vpop.f32.mrb[0].mxu0
    %358 = vmatprep.mubr.f32.mxu0 0.0
    %359 = vmatmul.mubr.f32.gmra.mrb[0].mxu0 %v165
    %v360 = vpop.f32.mrb[0].mxu0
    %v361 = vadd.f32 0.0, %v360
    %v362 = vpop.f32.mrb[0].mxu0
    %363 = vmatprep.mubr.f32.mxu0 0.0
    %364 = vmatmul.mubr.f32.gmra.mrb[0].mxu0 %v168
    %v365 = vpop.f32.mrb[0].mxu0
    %v366 = vadd.f32 0.0, %v365
    %v367 = vpop.f32.mrb[0].mxu0
    %368 = vdwg.mxu0
    %vm369 = vcmask 171008
    %v371 = vsel %vm369, %v35, 0
    %v374 = vsel %vm369, %v36, 0
    %v377 = vsel %vm369, %v37, 0
    %v380 = vsel %vm369, %v38, 0
    %v383 = vsel %vm369, %v39, 0
    %v386 = vsel %vm369, %v40, 0
    %v389 = vsel %vm369, %v41, 0
    %v392 = vsel %vm369, %v42, 0
    %v395 = vsel %vm369, %v43, 0
    %v398 = vsel %vm369, %v44, 0
    %v401 = vsel %vm369, %v45, 0
    %v404 = vsel %vm369, %v46, 0
    %v407 = vsel %vm369, %v47, 0
    %v410 = vsel %vm369, %v48, 0
    %v413 = vsel %vm369, %v49, 0
    %v416 = vsel %vm369, %v50, 0
    %v419 = vsel %vm369, %v51, 0
    %v422 = vsel %vm369, %v52, 0
    %v425 = vsel %vm369, %v53, 0
    %v428 = vsel %vm369, %v54, 0
    %v431 = vsel %vm369, %v55, 0
    %v434 = vsel %vm369, %v56, 0
    %v437 = vsel %vm369, %v57, 0
    %v440 = vsel %vm369, %v58, 0
    %v443 = vsel %vm369, %v59, 0
    %v446 = vsel %vm369, %v60, 0
    %vm448 = vcmask 1044480
    %v450 = vsel %vm448, %v63, 0
    %452 = vmatprep.subr.mxu0 0.0
    %453 = vmatpush1.msra.mxu0 %v61
    %454 = vmatprep.subr.mxu0 0.0
    %455 = vmatpush1.msra.mxu0 %v62
    %456 = vmatprep.subr.mxu0 0.0
    %457 = vmatpush1.msra.mxu0 %v450
    %458 = vmatprep.subr.mxu0 0.0
    %459 = vmatpush1.msra.mxu0 0.0
    %460 = vmatprep.subr.mxu0 0.0
    %461 = vmatpush1.msra.mxu0 0.0
    %462 = vmatprep.subr.mxu0 0.0
    %463 = vmatpush1.msra.mxu0 0.0
    %464 = vmatprep.subr.mxu0 0.0
    %465 = vmatpush1.msra.mxu0 0.0
    %466 = vmatprep.subr.mxu0 0.0
    %467 = vmatpush1.msra.mxu0 0.0
    %468 = vmatprep.subr.mxu0 0.0
    %469 = vmatpush1.msra.mxu0 0.0
    %470 = vmatprep.subr.mxu0 0.0
    %471 = vmatpush1.msra.mxu0 0.0
    %472 = vmatprep.subr.mxu0 0.0
    %473 = vmatpush1.msra.mxu0 0.0
    %474 = vmatprep.subr.mxu0 0.0
    %475 = vmatpush1.msra.mxu0 0.0
    %476 = vmatprep.subr.mxu0 0.0
    %477 = vmatpush1.msra.mxu0 0.0
    %478 = vmatprep.subr.mxu0 0.0
    %479 = vmatpush1.msra.mxu0 0.0
    %480 = vmatprep.subr.mxu0 0.0
    %481 = vmatpush1.msra.mxu0 0.0
    %482 = vmatprep.subr.mxu0 0.0
    %483 = vmatpush1.msra.mxu0 0.0
    %484 = vmatprep.subr.mxu0 0.0
    %485 = vmatpush1.msra.mxu0 0.0
    %486 = vmatprep.subr.mxu0 0.0
    %487 = vmatpush1.msra.mxu0 0.0
    %488 = vmatprep.subr.mxu0 0.0
    %489 = vmatpush1.msra.mxu0 0.0
    %490 = vmatprep.subr.mxu0 0.0
    %491 = vmatpush1.msra.mxu0 0.0
    %492 = vmatprep.subr.mxu0 0.0
    %493 = vmatpush1.msra.mxu0 0.0
    %494 = vmatprep.subr.mxu0 0.0
    %495 = vmatpush1.msra.mxu0 0.0
    %496 = vmatprep.subr.mxu0 0.0
    %497 = vmatpush1.msra.mxu0 0.0
    %498 = vmatprep.subr.mxu0 0.0
    %499 = vmatpush1.msra.mxu0 0.0
    %500 = vmatprep.subr.mxu0 0.0
    %501 = vmatpush1.msra.mxu0 0.0
    %502 = vmatprep.subr.mxu0 0.0
    %503 = vmatpush1.msra.mxu0 0.0
    %504 = vmatprep.subr.mxu0 0.0
    %505 = vmatpush1.msra.mxu0 0.0
    %506 = vmatprep.subr.mxu0 0.0
    %507 = vmatpush1.msra.mxu0 0.0
    %508 = vmatprep.subr.mxu0 0.0
    %509 = vmatpush1.msra.mxu0 0.0
    %510 = vmatprep.subr.mxu0 0.0
    %511 = vmatpush1.msra.mxu0 0.0
    %512 = vmatprep.subr.mxu0 0.0
    %513 = vmatpush1.msra.mxu0 0.0
    %514 = vmatprep.subr.mxu0 0.0
    %515 = vmatpush1.msra.mxu0 0.0
    %516 = vmatprep.mubr.f32.mxu0 0.0
    %517 = vmatmul.mubr.f32.gmra.mrb[0].mxu0 %v371
    %v518 = vpop.f32.mrb[0].mxu0
    %v519 = vadd.f32 %v241, %v518
    %v520 = vpop.f32.mrb[0].mxu0
    %521 = vmatprep.mubr.f32.mxu0 0.0
    %522 = vmatmul.mubr.f32.gmra.mrb[0].mxu0 %v374
    %v523 = vpop.f32.mrb[0].mxu0
    %v524 = vadd.f32 %v246, %v523
    %v525 = vpop.f32.mrb[0].mxu0
    %526 = vmatprep.mubr.f32.mxu0 0.0
    %527 = vmatmul.mubr.f32.gmra.mrb[0].mxu0 %v377
    %v528 = vpop.f32.mrb[0].mxu0
    %v529 = vadd.f32 %v251, %v528
    %v530 = vpop.f32.mrb[0].mxu0
    %531 = vmatprep.mubr.f32.mxu0 0.0
    %532 = vmatmul.mubr.f32.gmra.mrb[0].mxu0 %v380
    %v533 = vpop.f32.mrb[0].mxu0
    %v534 = vadd.f32 %v256, %v533
    %v535 = vpop.f32.mrb[0].mxu0
    %536 = vmatprep.mubr.f32.mxu0 0.0
    %537 = vmatmul.mubr.f32.gmra.mrb[0].mxu0 %v383
    %v538 = vpop.f32.mrb[0].mxu0
    %v539 = vadd.f32 %v261, %v538
    %v540 = vpop.f32.mrb[0].mxu0
    %541 = vmatprep.mubr.f32.mxu0 0.0
    %542 = vmatmul.mubr.f32.gmra.mrb[0].mxu0 %v386
    %v543 = vpop.f32.mrb[0].mxu0
    %v544 = vadd.f32 %v266, %v543
    %v545 = vpop.f32.mrb[0].mxu0
    %546 = vmatprep.mubr.f32.mxu0 0.0
    %547 = vmatmul.mubr.f32.gmra.mrb[0].mxu0 %v389
    %v548 = vpop.f32.mrb[0].mxu0
    %v549 = vadd.f32 %v271, %v548
    %v550 = vpop.f32.mrb[0].mxu0
    %551 = vmatprep.mubr.f32.mxu0 0.0
    %552 = vmatmul.mubr.f32.gmra.mrb[0].mxu0 %v392
    %v553 = vpop.f32.mrb[0].mxu0
    %v554 = vadd.f32 %v276, %v553
    %v555 = vpop.f32.mrb[0].mxu0
    %556 = vmatprep.mubr.f32.mxu0 0.0
    %557 = vmatmul.mubr.f32.gmra.mrb[0].mxu0 %v395
    %v558 = vpop.f32.mrb[0].mxu0
    %v559 = vadd.f32 %v281, %v558
    %v560 = vpop.f32.mrb[0].mxu0
    %561 = vmatprep.mubr.f32.mxu0 0.0
    %562 = vmatmul.mubr.f32.gmra.mrb[0].mxu0 %v398
    %v563 = vpop.f32.mrb[0].mxu0
    %v564 = vadd.f32 %v286, %v563
    %v565 = vpop.f32.mrb[0].mxu0
    %566 = vmatprep.mubr.f32.mxu0 0.0
    %567 = vmatmul.mubr.f32.gmra.mrb[0].mxu0 %v401
    %v568 = vpop.f32.mrb[0].mxu0
    %v569 = vadd.f32 %v291, %v568
    %v570 = vpop.f32.mrb[0].mxu0
    %571 = vmatprep.mubr.f32.mxu0 0.0
    %572 = vmatmul.mubr.f32.gmra.mrb[0].mxu0 %v404
    %v573 = vpop.f32.mrb[0].mxu0
    %v574 = vadd.f32 %v296, %v573
    %v575 = vpop.f32.mrb[0].mxu0
    %576 = vmatprep.mubr.f32.mxu0 0.0
    %577 = vmatmul.mubr.f32.gmra.mrb[0].mxu0 %v407
    %v578 = vpop.f32.mrb[0].mxu0
    %v579 = vadd.f32 %v301, %v578
    %v580 = vpop.f32.mrb[0].mxu0
    %581 = vmatprep.mubr.f32.mxu0 0.0
    %582 = vmatmul.mubr.f32.gmra.mrb[0].mxu0 %v410
    %v583 = vpop.f32.mrb[0].mxu0
    %v584 = vadd.f32 %v306, %v583
    %v585 = vpop.f32.mrb[0].mxu0
    %586 = vmatprep.mubr.f32.mxu0 0.0
    %587 = vmatmul.mubr.f32.gmra.mrb[0].mxu0 %v413
    %v588 = vpop.f32.mrb[0].mxu0
    %v589 = vadd.f32 %v311, %v588
    %v590 = vpop.f32.mrb[0].mxu0
    %591 = vmatprep.mubr.f32.mxu0 0.0
    %592 = vmatmul.mubr.f32.gmra.mrb[0].mxu0 %v416
    %v593 = vpop.f32.mrb[0].mxu0
    %v594 = vadd.f32 %v316, %v593
    %v595 = vpop.f32.mrb[0].mxu0
    %596 = vmatprep.mubr.f32.mxu0 0.0
    %597 = vmatmul.mubr.f32.gmra.mrb[0].mxu0 %v419
    %v598 = vpop.f32.mrb[0].mxu0
    %v599 = vadd.f32 %v321, %v598
    %v600 = vpop.f32.mrb[0].mxu0
    %601 = vmatprep.mubr.f32.mxu0 0.0
    %602 = vmatmul.mubr.f32.gmra.mrb[0].mxu0 %v422
    %v603 = vpop.f32.mrb[0].mxu0
    %v604 = vadd.f32 %v326, %v603
    %v605 = vpop.f32.mrb[0].mxu0
    %606 = vmatprep.mubr.f32.mxu0 0.0
    %607 = vmatmul.mubr.f32.gmra.mrb[0].mxu0 %v425
    %v608 = vpop.f32.mrb[0].mxu0
    %v609 = vadd.f32 %v331, %v608
    %v610 = vpop.f32.mrb[0].mxu0
    %611 = vmatprep.mubr.f32.mxu0 0.0
    %612 = vmatmul.mubr.f32.gmra.mrb[0].mxu0 %v428
    %v613 = vpop.f32.mrb[0].mxu0
    %v614 = vadd.f32 %v336, %v613
    %v615 = vpop.f32.mrb[0].mxu0
    %616 = vmatprep.mubr.f32.mxu0 0.0
    %617 = vmatmul.mubr.f32.gmra.mrb[0].mxu0 %v431
    %v618 = vpop.f32.mrb[0].mxu0
    %v619 = vadd.f32 %v341, %v618
    %v620 = vpop.f32.mrb[0].mxu0
    %621 = vmatprep.mubr.f32.mxu0 0.0
    %622 = vmatmul.mubr.f32.gmra.mrb[0].mxu0 %v434
    %v623 = vpop.f32.mrb[0].mxu0
    %v624 = vadd.f32 %v346, %v623
    %v625 = vpop.f32.mrb[0].mxu0
    %626 = vmatprep.mubr.f32.mxu0 0.0
    %627 = vmatmul.mubr.f32.gmra.mrb[0].mxu0 %v437
    %v628 = vpop.f32.mrb[0].mxu0
    %v629 = vadd.f32 %v351, %v628
    %v630 = vpop.f32.mrb[0].mxu0
    %631 = vmatprep.mubr.f32.mxu0 0.0
    %632 = vmatmul.mubr.f32.gmra.mrb[0].mxu0 %v440
    %v633 = vpop.f32.mrb[0].mxu0
    %v634 = vadd.f32 %v356, %v633
    %v635 = vpop.f32.mrb[0].mxu0
    %636 = vmatprep.mubr.f32.mxu0 0.0
    %637 = vmatmul.mubr.f32.gmra.mrb[0].mxu0 %v443
    %v638 = vpop.f32.mrb[0].mxu0
    %v639 = vadd.f32 %v361, %v638
    %v640 = vpop.f32.mrb[0].mxu0
    %641 = vmatprep.mubr.f32.mxu0 0.0
    %642 = vmatmul.mubr.f32.gmra.mrb[0].mxu0 %v446
    %v643 = vpop.f32.mrb[0].mxu0
    %v644 = vadd.f32 %v366, %v643
    %v645 = vpop.f32.mrb[0].mxu0
    %646 = vdwg.mxu0
    %v647 = vld [vmem:[%s4] sm:$0x1]
    %v649 = vlaneseq
    %v650 = vshrl.u32 %v649, 7
    %v651 = vsub.s32 0, %v650
    %v652 = vrot.slane %v647, %v651
    %v654 = vadd.f32 %v519, %v652
    %v655 = vadd.f32 %v524, %v652
    %v656 = vadd.f32 %v529, %v652
    %v657 = vadd.f32 %v534, %v652
    %v658 = vadd.f32 %v539, %v652
    %v659 = vadd.f32 %v544, %v652
    %v660 = vadd.f32 %v549, %v652
    %v661 = vadd.f32 %v554, %v652
    %v662 = vadd.f32 %v559, %v652
    %v663 = vadd.f32 %v564, %v652
    %v664 = vadd.f32 %v569, %v652
    %v665 = vadd.f32 %v574, %v652
    %v666 = vadd.f32 %v579, %v652
    %v667 = vadd.f32 %v584, %v652
    %v668 = vadd.f32 %v589, %v652
    %v669 = vadd.f32 %v594, %v652
    %v670 = vadd.f32 %v599, %v652
    %v671 = vadd.f32 %v604, %v652
    %v672 = vadd.f32 %v609, %v652
    %v673 = vadd.f32 %v614, %v652
    %v674 = vadd.f32 %v619, %v652
    %v675 = vadd.f32 %v624, %v652
    %v676 = vadd.f32 %v629, %v652
    %v677 = vadd.f32 %v634, %v652
    %v678 = vadd.f32 %v639, %v652
    %v679 = vadd.f32 %v644, %v652
    %v680 = vmax.f32 %v654, 0.0
    %v681 = vmax.f32 %v655, 0.0
    %v682 = vmax.f32 %v656, 0.0
    %v683 = vmax.f32 %v657, 0.0
    %v684 = vmax.f32 %v658, 0.0
    %v685 = vmax.f32 %v659, 0.0
    %v686 = vmax.f32 %v660, 0.0
    %v687 = vmax.f32 %v661, 0.0
    %v688 = vmax.f32 %v662, 0.0
    %v689 = vmax.f32 %v663, 0.0
    %v690 = vmax.f32 %v664, 0.0
    %v691 = vmax.f32 %v665, 0.0
    %v692 = vmax.f32 %v666, 0.0
    %v693 = vmax.f32 %v667, 0.0
    %v694 = vmax.f32 %v668, 0.0
    %v695 = vmax.f32 %v669, 0.0
    %v696 = vmax.f32 %v670, 0.0
    %v697 = vmax.f32 %v671, 0.0
    %v698 = vmax.f32 %v672, 0.0
    %v699 = vmax.f32 %v673, 0.0
    %v700 = vmax.f32 %v674, 0.0
    %v701 = vmax.f32 %v675, 0.0
    %v702 = vmax.f32 %v676, 0.0
    %v703 = vmax.f32 %v677, 0.0
    %v704 = vmax.f32 %v678, 0.0
    %v705 = vmax.f32 %v679, 0.0
    %v706 = vld [vmem:[%s5] sm:$0xff]
    %v707 = vld [vmem:[%s5 + $0x8] sm:$0xff]
    %v708 = vld [vmem:[%s5 + $0x10] sm:$0xff]
    %v709 = vld [vmem:[%s5 + $0x18] sm:$0xff]
    %v710 = vld [vmem:[%s5 + $0x20] sm:$0xff]
    %v711 = vld [vmem:[%s5 + $0x28] sm:$0xff]
    %v712 = vld [vmem:[%s5 + $0x30] sm:$0xff]
    %v713 = vld [vmem:[%s5 + $0x38] sm:$0xff]
    %v714 = vld [vmem:[%s5 + $0x40] sm:$0xff]
    %v715 = vld [vmem:[%s5 + $0x48] sm:$0xff]
    %v716 = vld [vmem:[%s5 + $0x50] sm:$0xff]
    %v717 = vld [vmem:[%s5 + $0x58] sm:$0xff]
    %v718 = vld [vmem:[%s5 + $0x60] sm:$0xff]
    %v719 = vld [vmem:[%s5 + $0x68] sm:$0xff]
    %v720 = vld [vmem:[%s5 + $0x70] sm:$0xff]
    %v721 = vld [vmem:[%s5 + $0x78] sm:$0xff]
    %v722 = vld [vmem:[%s6] sm:$0x1]
    %v724 = vlaneseq
    %v725 = vshrl.u32 %v724, 7
    %v726 = vsub.s32 0, %v725
    %v727 = vrot.slane %v722, %v726
    %729 = vmatprep.subr.mxu0 0.0
    %730 = vmatpush1.msra.mxu0 %v706
    %731 = vmatprep.subr.mxu0 0.0
    %732 = vmatpush1.msra.mxu0 %v707
    %733 = vmatprep.subr.mxu0 0.0
    %734 = vmatpush1.msra.mxu0 %v708
    %735 = vmatprep.subr.mxu0 0.0
    %736 = vmatpush1.msra.mxu0 %v709
    %737 = vmatprep.subr.mxu0 0.0
    %738 = vmatpush1.msra.mxu0 %v710
    %739 = vmatprep.subr.mxu0 0.0
    %740 = vmatpush1.msra.mxu0 %v711
    %741 = vmatprep.subr.mxu0 0.0
    %742 = vmatpush1.msra.mxu0 %v712
    %743 = vmatprep.subr.mxu0 0.0
    %744 = vmatpush1.msra.mxu0 %v713
    %745 = vmatprep.subr.mxu0 0.0
    %746 = vmatpush1.msra.mxu0 %v714
    %747 = vmatprep.subr.mxu0 0.0
    %748 = vmatpush1.msra.mxu0 %v715
    %749 = vmatprep.subr.mxu0 0.0
    %750 = vmatpush1.msra.mxu0 %v716
    %751 = vmatprep.subr.mxu0 0.0
    %752 = vmatpush1.msra.mxu0 %v717
    %753 = vmatprep.subr.mxu0 0.0
    %754 = vmatpush1.msra.mxu0 %v718
    %755 = vmatprep.subr.mxu0 0.0
    %756 = vmatpush1.msra.mxu0 %v719
    %757 = vmatprep.subr.mxu0 0.0
    %758 = vmatpush1.msra.mxu0 %v720
    %759 = vmatprep.subr.mxu0 0.0
    %760 = vmatpush1.msra.mxu0 %v721
    %761 = vmatprep.subr.mxu0 0.0
    %762 = vmatpush1.msra.mxu0 0.0
    %763 = vmatprep.subr.mxu0 0.0
    %764 = vmatpush1.msra.mxu0 0.0
    %765 = vmatprep.subr.mxu0 0.0
    %766 = vmatpush1.msra.mxu0 0.0
    %767 = vmatprep.subr.mxu0 0.0
    %768 = vmatpush1.msra.mxu0 0.0
    %769 = vmatprep.subr.mxu0 0.0
    %770 = vmatpush1.msra.mxu0 0.0
    %771 = vmatprep.subr.mxu0 0.0
    %772 = vmatpush1.msra.mxu0 0.0
    %773 = vmatprep.subr.mxu0 0.0
    %774 = vmatpush1.msra.mxu0 0.0
    %775 = vmatprep.subr.mxu0 0.0
    %776 = vmatpush1.msra.mxu0 0.0
    %777 = vmatprep.subr.mxu0 0.0
    %778 = vmatpush1.msra.mxu0 0.0
    %779 = vmatprep.subr.mxu0 0.0
    %780 = vmatpush1.msra.mxu0 0.0
    %781 = vmatprep.subr.mxu0 0.0
    %782 = vmatpush1.msra.mxu0 0.0
    %783 = vmatprep.subr.mxu0 0.0
    %784 = vmatpush1.msra.mxu0 0.0
    %785 = vmatprep.subr.mxu0 0.0
    %786 = vmatpush1.msra.mxu0 0.0
    %787 = vmatprep.subr.mxu0 0.0
    %788 = vmatpush1.msra.mxu0 0.0
    %789 = vmatprep.subr.mxu0 0.0
    %790 = vmatpush1.msra.mxu0 0.0
    %791 = vmatprep.subr.mxu0 0.0
    %792 = vmatpush1.msra.mxu0 0.0
    %793 = vmatprep.mubr.f32.mxu0 0.0
    %794 = vmatmul.mubr.f32.gmra.mrb[0].mxu0 %v680
    %v795 = vpop.f32.mrb[0].mxu0
    %v796 = vadd.f32 %v727, %v795
    %v797 = vpop.f32.mrb[0].mxu0
    %798 = vmatprep.mubr.f32.mxu0 0.0
    %799 = vmatmul.mubr.f32.gmra.mrb[0].mxu0 %v681
    %v800 = vpop.f32.mrb[0].mxu0
    %v801 = vadd.f32 %v727, %v800
    %v802 = vpop.f32.mrb[0].mxu0
    %803 = vmatprep.mubr.f32.mxu0 0.0
    %804 = vmatmul.mubr.f32.gmra.mrb[0].mxu0 %v682
    %v805 = vpop.f32.mrb[0].mxu0
    %v806 = vadd.f32 %v727, %v805
    %v807 = vpop.f32.mrb[0].mxu0
    %808 = vmatprep.mubr.f32.mxu0 0.0
    %809 = vmatmul.mubr.f32.gmra.mrb[0].mxu0 %v683
    %v810 = vpop.f32.mrb[0].mxu0
    %v811 = vadd.f32 %v727, %v810
    %v812 = vpop.f32.mrb[0].mxu0
    %813 = vmatprep.mubr.f32.mxu0 0.0
    %814 = vmatmul.mubr.f32.gmra.mrb[0].mxu0 %v684
    %v815 = vpop.f32.mrb[0].mxu0
    %v816 = vadd.f32 %v727, %v815
    %v817 = vpop.f32.mrb[0].mxu0
    %818 = vmatprep.mubr.f32.mxu0 0.0
    %819 = vmatmul.mubr.f32.gmra.mrb[0].mxu0 %v685
    %v820 = vpop.f32.mrb[0].mxu0
    %v821 = vadd.f32 %v727, %v820
    %v822 = vpop.f32.mrb[0].mxu0
    %823 = vmatprep.mubr.f32.mxu0 0.0
    %824 = vmatmul.mubr.f32.gmra.mrb[0].mxu0 %v686
    %v825 = vpop.f32.mrb[0].mxu0
    %v826 = vadd.f32 %v727, %v825
    %v827 = vpop.f32.mrb[0].mxu0
    %828 = vmatprep.mubr.f32.mxu0 0.0
    %829 = vmatmul.mubr.f32.gmra.mrb[0].mxu0 %v687
    %v830 = vpop.f32.mrb[0].mxu0
    %v831 = vadd.f32 %v727, %v830
    %v832 = vpop.f32.mrb[0].mxu0
    %833 = vmatprep.mubr.f32.mxu0 0.0
    %834 = vmatmul.mubr.f32.gmra.mrb[0].mxu0 %v688
    %v835 = vpop.f32.mrb[0].mxu0
    %v836 = vadd.f32 %v727, %v835
    %v837 = vpop.f32.mrb[0].mxu0
    %838 = vmatprep.mubr.f32.mxu0 0.0
    %839 = vmatmul.mubr.f32.gmra.mrb[0].mxu0 %v689
    %v840 = vpop.f32.mrb[0].mxu0
    %v841 = vadd.f32 %v727, %v840
    %v842 = vpop.f32.mrb[0].mxu0
    %843 = vmatprep.mubr.f32.mxu0 0.0
    %844 = vmatmul.mubr.f32.gmra.mrb[0].mxu0 %v690
    %v845 = vpop.f32.mrb[0].mxu0
    %v846 = vadd.f32 %v727, %v845
    %v847 = vpop.f32.mrb[0].mxu0
    %848 = vmatprep.mubr.f32.mxu0 0.0
    %849 = vmatmul.mubr.f32.gmra.mrb[0].mxu0 %v691
    %v850 = vpop.f32.mrb[0].mxu0
    %v851 = vadd.f32 %v727, %v850
    %v852 = vpop.f32.mrb[0].mxu0
    %853 = vmatprep.mubr.f32.mxu0 0.0
    %854 = vmatmul.mubr.f32.gmra.mrb[0].mxu0 %v692
    %v855 = vpop.f32.mrb[0].mxu0
    %v856 = vadd.f32 %v727, %v855
    %v857 = vpop.f32.mrb[0].mxu0
    %858 = vmatprep.mubr.f32.mxu0 0.0
    %859 = vmatmul.mubr.f32.gmra.mrb[0].mxu0 %v693
    %v860 = vpop.f32.mrb[0].mxu0
    %v861 = vadd.f32 %v727, %v860
    %v862 = vpop.f32.mrb[0].mxu0
    %863 = vmatprep.mubr.f32.mxu0 0.0
    %864 = vmatmul.mubr.f32.gmra.mrb[0].mxu0 %v694
    %v865 = vpop.f32.mrb[0].mxu0
    %v866 = vadd.f32 %v727, %v865
    %v867 = vpop.f32.mrb[0].mxu0
    %868 = vmatprep.mubr.f32.mxu0 0.0
    %869 = vmatmul.mubr.f32.gmra.mrb[0].mxu0 %v695
    %v870 = vpop.f32.mrb[0].mxu0
    %v871 = vadd.f32 %v727, %v870
    %v872 = vpop.f32.mrb[0].mxu0
    %873 = vmatprep.mubr.f32.mxu0 0.0
    %874 = vmatmul.mubr.f32.gmra.mrb[0].mxu0 %v696
    %v875 = vpop.f32.mrb[0].mxu0
    %v876 = vadd.f32 %v727, %v875
    %v877 = vpop.f32.mrb[0].mxu0
    %878 = vmatprep.mubr.f32.mxu0 0.0
    %879 = vmatmul.mubr.f32.gmra.mrb[0].mxu0 %v697
    %v880 = vpop.f32.mrb[0].mxu0
    %v881 = vadd.f32 %v727, %v880
    %v882 = vpop.f32.mrb[0].mxu0
    %883 = vmatprep.mubr.f32.mxu0 0.0
    %884 = vmatmul.mubr.f32.gmra.mrb[0].mxu0 %v698
    %v885 = vpop.f32.mrb[0].mxu0
    %v886 = vadd.f32 %v727, %v885
    %v887 = vpop.f32.mrb[0].mxu0
    %888 = vmatprep.mubr.f32.mxu0 0.0
    %889 = vmatmul.mubr.f32.gmra.mrb[0].mxu0 %v699
    %v890 = vpop.f32.mrb[0].mxu0
    %v891 = vadd.f32 %v727, %v890
    %v892 = vpop.f32.mrb[0].mxu0
    %893 = vmatprep.mubr.f32.mxu0 0.0
    %894 = vmatmul.mubr.f32.gmra.mrb[0].mxu0 %v700
    %v895 = vpop.f32.mrb[0].mxu0
    %v896 = vadd.f32 %v727, %v895
    %v897 = vpop.f32.mrb[0].mxu0
    %898 = vmatprep.mubr.f32.mxu0 0.0
    %899 = vmatmul.mubr.f32.gmra.mrb[0].mxu0 %v701
    %v900 = vpop.f32.mrb[0].mxu0
    %v901 = vadd.f32 %v727, %v900
    %v902 = vpop.f32.mrb[0].mxu0
    %903 = vmatprep.mubr.f32.mxu0 0.0
    %904 = vmatmul.mubr.f32.gmra.mrb[0].mxu0 %v702
    %v905 = vpop.f32.mrb[0].mxu0
    %v906 = vadd.f32 %v727, %v905
    %v907 = vpop.f32.mrb[0].mxu0
    %908 = vmatprep.mubr.f32.mxu0 0.0
    %909 = vmatmul.mubr.f32.gmra.mrb[0].mxu0 %v703
    %v910 = vpop.f32.mrb[0].mxu0
    %v911 = vadd.f32 %v727, %v910
    %v912 = vpop.f32.mrb[0].mxu0
    %913 = vmatprep.mubr.f32.mxu0 0.0
    %914 = vmatmul.mubr.f32.gmra.mrb[0].mxu0 %v704
    %v915 = vpop.f32.mrb[0].mxu0
    %v916 = vadd.f32 %v727, %v915
    %v917 = vpop.f32.mrb[0].mxu0
    %918 = vmatprep.mubr.f32.mxu0 0.0
    %919 = vmatmul.mubr.f32.gmra.mrb[0].mxu0 %v705
    %v920 = vpop.f32.mrb[0].mxu0
    %v921 = vadd.f32 %v727, %v920
    %v922 = vpop.f32.mrb[0].mxu0
    %923 = vdwg.mxu0
    %v924 = vmax.f32 %v796, 0.0
    %v925 = vmax.f32 %v801, 0.0
    %v926 = vmax.f32 %v806, 0.0
    %v927 = vmax.f32 %v811, 0.0
    %v928 = vmax.f32 %v816, 0.0
    %v929 = vmax.f32 %v821, 0.0
    %v930 = vmax.f32 %v826, 0.0
    %v931 = vmax.f32 %v831, 0.0
    %v932 = vmax.f32 %v836, 0.0
    %v933 = vmax.f32 %v841, 0.0
    %v934 = vmax.f32 %v846, 0.0
    %v935 = vmax.f32 %v851, 0.0
    %v936 = vmax.f32 %v856, 0.0
    %v937 = vmax.f32 %v861, 0.0
    %v938 = vmax.f32 %v866, 0.0
    %v939 = vmax.f32 %v871, 0.0
    %v940 = vmax.f32 %v876, 0.0
    %v941 = vmax.f32 %v881, 0.0
    %v942 = vmax.f32 %v886, 0.0
    %v943 = vmax.f32 %v891, 0.0
    %v944 = vmax.f32 %v896, 0.0
    %v945 = vmax.f32 %v901, 0.0
    %v946 = vmax.f32 %v906, 0.0
    %v947 = vmax.f32 %v911, 0.0
    %v948 = vmax.f32 %v916, 0.0
    %v949 = vmax.f32 %v921, 0.0
    %v950 = vld [vmem:[%s7] sm:$0x1]
    %v951 = vld [vmem:[#allocation2] sm:$0x1]
    %953 = vset.pattern.permute.xlu0 0
    %954 = vperm.xlu0 %953, %v951
    %v955 = vpop.permute.xlu0 %954
    %v957 = vlaneseq
    %v958 = vshrl.u32 %v957, 7
    %v959 = vsub.s32 0, %v958
    %v960 = vrot.slane %v955, %v959
    %961 = vmatprep.subr.mxu0 0.0
    %962 = vmatpush1.xpose.msra.mxu0 %v924
    %963 = vmatprep.subr.mxu0 0.0
    %964 = vmatpush1.xpose.msra.mxu0 %v925
    %965 = vmatprep.subr.mxu0 0.0
    %966 = vmatpush1.xpose.msra.mxu0 %v926
    %967 = vmatprep.subr.mxu0 0.0
    %968 = vmatpush1.xpose.msra.mxu0 %v927
    %969 = vmatprep.subr.mxu0 0.0
    %970 = vmatpush1.xpose.msra.mxu0 %v928
    %971 = vmatprep.subr.mxu0 0.0
    %972 = vmatpush1.xpose.msra.mxu0 %v929
    %973 = vmatprep.subr.mxu0 0.0
    %974 = vmatpush1.xpose.msra.mxu0 %v930
    %975 = vmatprep.subr.mxu0 0.0
    %976 = vmatpush1.xpose.msra.mxu0 %v931
    %977 = vmatprep.subr.mxu0 0.0
    %978 = vmatpush1.xpose.msra.mxu0 %v932
    %979 = vmatprep.subr.mxu0 0.0
    %980 = vmatpush1.xpose.msra.mxu0 %v933
    %981 = vmatprep.subr.mxu0 0.0
    %982 = vmatpush1.xpose.msra.mxu0 %v934
    %983 = vmatprep.subr.mxu0 0.0
    %984 = vmatpush1.xpose.msra.mxu0 %v935
    %985 = vmatprep.subr.mxu0 0.0
    %986 = vmatpush1.xpose.msra.mxu0 %v936
    %987 = vmatprep.subr.mxu0 0.0
    %988 = vmatpush1.xpose.msra.mxu0 %v937
    %989 = vmatprep.subr.mxu0 0.0
    %990 = vmatpush1.xpose.msra.mxu0 %v938
    %991 = vmatprep.subr.mxu0 0.0
    %992 = vmatpush1.xpose.msra.mxu0 %v939
    %993 = vmatprep.subr.mxu0 0.0
    %994 = vmatpush1.xpose.msra.mxu0 %v940
    %995 = vmatprep.subr.mxu0 0.0
    %996 = vmatpush1.xpose.msra.mxu0 %v941
    %997 = vmatprep.subr.mxu0 0.0
    %998 = vmatpush1.xpose.msra.mxu0 %v942
    %999 = vmatprep.subr.mxu0 0.0
    %1000 = vmatpush1.xpose.msra.mxu0 %v943
    %1001 = vmatprep.subr.mxu0 0.0
    %1002 = vmatpush1.xpose.msra.mxu0 %v944
    %1003 = vmatprep.subr.mxu0 0.0
    %1004 = vmatpush1.xpose.msra.mxu0 %v945
    %1005 = vmatprep.subr.mxu0 0.0
    %1006 = vmatpush1.xpose.msra.mxu0 %v946
    %1007 = vmatprep.subr.mxu0 0.0
    %1008 = vmatpush1.xpose.msra.mxu0 %v947
    %1009 = vmatprep.subr.mxu0 0.0
    %1010 = vmatpush1.xpose.msra.mxu0 %v948
    %1011 = vmatprep.subr.mxu0 0.0
    %1012 = vmatpush1.xpose.msra.mxu0 %v949
    %1013 = vmatprep.subr.mxu0 0.0
    %1014 = vmatpush1.xpose.msra.mxu0 0.0
    %1015 = vmatprep.subr.mxu0 0.0
    %1016 = vmatpush1.xpose.msra.mxu0 0.0
    %1017 = vmatprep.subr.mxu0 0.0
    %1018 = vmatpush1.xpose.msra.mxu0 0.0
    %1019 = vmatprep.subr.mxu0 0.0
    %1020 = vmatpush1.xpose.msra.mxu0 0.0
    %1021 = vmatprep.subr.mxu0 0.0
    %1022 = vmatpush1.xpose.msra.mxu0 0.0
    %1023 = vmatprep.subr.mxu0 0.0
    %1024 = vmatpush1.xpose.msra.mxu0 0.0
    %1025 = vmatprep.mubr.f32.mxu0 0.0
    %1026 = vmatmul.mubr.f32.gmra.mrb[0].mxu0 %v950
    %v1027 = vpop.f32.mrb[0].mxu0
    %v1028 = vadd.f32 %v960, %v1027
    %v1029 = vpop.f32.mrb[0].mxu0
    %v1030 = vadd.f32 %v960, %v1029
    %1031 = vdwg.mxu0
    %v1034 = vcombine.low %v1028, %v1030
    %v1036 = vunpack.c.l.s4 1966171168
    %v1037 = vunpack.c.0.s8 %v1036
    %v1038 = vlaneseq
    %v1039 = vshrl.u32 %v1038, 7
    %v1040 = vsub.s32 %v1037, %v1039
    %v1041 = vrot.slane %v1034, %v1040
    %v1043 = vunpack.c.l.s4 1966171168
    %v1044 = vunpack.c.0.s8 %v1043
    %v1045 = vlaneseq
    %v1046 = vshrl.u32 %v1045, 7
    %v1047 = vsub.s32 %v1044, %v1046
    %v1048 = vrot.slane %v1041, %v1047
    %v1050 = vlaneseq
    %vm1051 = vcmp.ge.s32.totalorder %v1050, 0
    %vm1052 = vcmp.lt.s32.totalorder %v1050, 208
    %vm1053 = vmand %vm1051, %vm1052
    %1054 = vst.msk [vmem:[#allocation3] sm:$0x3] %vm1053, %v1048
    // Predicated region
    $region38: #{tpu_custom_call.1} parent=1 // pred_check
      _
    $region39: #{tpu_custom_call.1} parent=1 // pred_check_branch
      %1056 = sbr.rel (0) target = $region41
    $region40: #{tpu_custom_call.1} parent=1 // pred_region
      %s1058 = ssub.s32 32, 32
      %1059 = vsyncadd [#allocation4], %s1058
      %s1061 = sshll.u32 [#allocation3], 4
      %s1062 = int_to_ptr.vmem [resolvable:$true] %s1061
      %1064 = dma.vmem_to_hbm [thread:$0]  %s1062, 32, %s9, [#allocation4]
    $region41: #{tpu_custom_call.1} parent=1 // pred_fallthru
      _
    // Predicated region
    $region42: #{tpu_custom_call.1} parent=1 // pred_check
      _
    $region43: #{tpu_custom_call.1} parent=1 // pred_check_branch
      %1066 = sbr.rel (0) target = $region45
    $region44: #{tpu_custom_call.1} parent=1 // pred_region
      %1067 = dma.done [#allocation4], 32
    $region45: #{tpu_custom_call.1} parent=1 // pred_fallthru
      _
    %1068 = vsyncpa [#allocation4], 1

</llo_original>
